<compile_context>
chip_gen: v7x
topology: tpu7x:2x2x1
jax: 0.10.0
libtpu: 0.0.40
codegen_flags: <defaults>
</compile_context>

<pallas_src>
import jax
import jax.numpy as jnp
from jax.experimental import pallas as pl
from jax.experimental.pallas import tpu as pltpu


# ------------------------------- Pallas kernel ------------------------------

def attn_kernel(x_ref, w_ref, b_ref, o_ref):
    """out = x @ W_fused + b_fused for one (tn, E) token tile.

    x_ref : (tn, E)  input dtype (cast to bf16 for the MXU)
    w_ref : (E, E)   bf16 fused weight  (Wv @ Wproj)
    b_ref : (1, E)   f32 fused bias     (bv @ Wproj + bproj)
    o_ref : (tn, E)  output
    """
    x = x_ref[...].astype(jnp.bfloat16)
    acc = jnp.dot(x, w_ref[...], preferred_element_type=jnp.float32)
    o_ref[...] = (acc + b_ref[...]).astype(o_ref.dtype)


# ----------------------------- wrapper helpers -------------------------------

_VMEM_TILE_BUDGET = 40 << 20   # headroom under the 48 MiB cap used for the limit
_VMEM_LIMIT_CAP = 48 << 20     # safe on v7x (64 MiB physical VMEM)


def _pipeline_vmem_bytes(tn, E, x_bytes, out_bytes):
    """Approximate VMEM footprint of the pipelined pallas_call."""
    return (2 * tn * E * x_bytes        # x tiles (double-buffered)
            + 2 * tn * E * out_bytes    # out tiles (double-buffered)
            + E * E * 2                 # bf16 fused weight (single-buffered)
            + E * 4)                    # f32 fused bias


def _choose_token_tile(N, tn, E, x_bytes, out_bytes):
    if N <= tn:
        return N                        # full-extent block: always a legal shape
    tn = max(256, (tn // 256) * 256)    # keep the tile a multiple of 256
    # Shrink until the double-buffered footprint fits the VMEM budget.
    while tn > 256 and _pipeline_vmem_bytes(tn, E, x_bytes, out_bytes) > _VMEM_TILE_BUDGET:
        tn //= 2
    # Keep >= 4 tiles so both v7x TensorCores stay busy (harmless on v5e/v6e).
    while tn > 256 and pl.cdiv(N, tn) < 4:
        tn //= 2
    return tn


def fuse_attention_params(params):
    """Fold c_attn's V slice into c_proj once (call per weight update, not per step)."""
    E = params["w_proj"].shape[0]
    w_v = params["w_qkv"][:, 2 * E:3 * E]                       # (E, E)
    b_v = params["b_qkv"][2 * E:3 * E]                          # (E,)
    w_fused = jnp.dot(w_v, params["w_proj"],
                      preferred_element_type=jnp.float32).astype(jnp.bfloat16)
    b_fused = (jnp.dot(b_v, params["w_proj"],
                       preferred_element_type=jnp.float32)
               + params["b_proj"]).reshape(1, E).astype(jnp.float32)
    return w_fused, b_fused


# --------------------------------- wrapper ----------------------------------

def attention_forward(x, w_fused, b_fused, *, tn=512, out_dtype=None):
    """x: (B, T, E).  Returns (B, T, E) matching Attention.forward semantics
    (c_proj applied to the V slice of c_attn(x); the SDPA output is discarded)."""
    B, T, E = x.shape
    N = B * T
    out_dtype = x.dtype if out_dtype is None else jnp.dtype(out_dtype)
    x_bytes = jnp.dtype(x.dtype).itemsize
    o_bytes = jnp.dtype(out_dtype).itemsize

    tn_eff = _choose_token_tile(N, tn, E, x_bytes, o_bytes)
    grid_n = pl.cdiv(N, tn_eff)
    xs = x.reshape(N, E)

    vmem_limit = min(
        _VMEM_LIMIT_CAP,
        max(32 << 20, int(1.5 * _pipeline_vmem_bytes(tn_eff, E, x_bytes, o_bytes))))

    def _run(const_pipeline_mode):
        const_kw = ({} if const_pipeline_mode is None
                    else {"pipeline_mode": const_pipeline_mode})
        return pl.pallas_call(
            attn_kernel,
            out_shape=jax.ShapeDtypeStruct((N, E), out_dtype),
            grid=(grid_n,),
            in_specs=[
                pl.BlockSpec((tn_eff, E), lambda i: (i, 0)),            # x tile
                pl.BlockSpec((E, E), lambda i: (0, 0), **const_kw),     # fused W (bf16)
                pl.BlockSpec((1, E), lambda i: (0, 0), **const_kw),     # fused b (f32)
            ],
            out_specs=pl.BlockSpec((tn_eff, E), lambda i: (i, 0)),
            compiler_params=pltpu.CompilerParams(
                dimension_semantics=("parallel",),
                vmem_limit_bytes=vmem_limit,
            ),
        )(xs, w_fused, b_fused)

    try:
        # Single-buffer the constant weight/bias (their block never changes).
        out = _run(pl.Buffered(1))
    except Exception:
        # Fallback for Pallas builds without per-BlockSpec pipeline_mode support;
        # only costs one extra (E, E) bf16 VMEM buffer.
        out = _run(None)

    return out.reshape(B, T, E)


# ------------------------------- param init ---------------------------------

def init_params(key, embed_dim):
    E = embed_dim
    k1, k2, k3, k4 = jax.random.split(key, 4)
    std = 0.02
    return dict(
        w_qkv=std * jax.random.normal(k1, (E, 3 * E), jnp.float32),
        b_qkv=std * jax.random.normal(k2, (3 * E,), jnp.float32),
        w_proj=std * jax.random.normal(k3, (E, E), jnp.float32),
        b_proj=std * jax.random.normal(k4, (E,), jnp.float32),
    )


def attention_reference(x, params):
    """Pure-JAX f32 reference matching Attention.forward exactly."""
    B, T, E = x.shape
    qkv = jnp.einsum("bte,ef->btf", x, params["w_qkv"]) + params["b_qkv"]
    v = qkv[..., 2 * E:3 * E]              # head rearrange round-trip == identity
    return jnp.einsum("bte,ef->btf", v, params["w_proj"]) + params["b_proj"]


# ----------------------------------- main ------------------------------------

if __name__ == "__main__":
    embed_dim, n_heads, seq_len = 32, 4, 8
    B, T = 2, seq_len

    key = jax.random.PRNGKey(0)
    pkey, xkey = jax.random.split(key)
    params = init_params(pkey, embed_dim)
    x = jax.random.normal(xkey, (B, T, embed_dim), jnp.float32)

    # Fuse weights once (per weight update), reuse across forward calls.
    w_fused, b_fused = fuse_attention_params(params)

    out = attention_forward(x, w_fused, b_fused, tn=512)
    jax.block_until_ready(out)

    assert out.shape == (B, T, embed_dim)
    assert out.dtype == jnp.float32
    assert bool(jnp.all(jnp.isfinite(out)))

    # numeric check vs. f32 reference (tolerance accounts for bf16 weight cast)
    ref = attention_reference(x, params)
    assert bool(jnp.allclose(out, ref, rtol=5e-2, atol=1e-2)), "mismatch vs reference"

    print("KERNEL_OK")
</pallas_src>

<mosaic_0001>
module attributes {stable_mosaic.version = 11 : i64} {
  func.func @attn_kernel(%arg0: i32, %arg1: memref<16x32xf32, #tpu.memory_space<vmem>>, %arg2: memref<32x32xbf16, #tpu.memory_space<vmem>>, %arg3: memref<1x32xf32, #tpu.memory_space<vmem>>, %arg4: memref<16x32xf32, #tpu.memory_space<vmem>>) attributes {dimension_semantics = [#tpu.dimension_semantics<parallel>], iteration_bounds = array<i64: 1>, scalar_prefetch = 0 : i64, scratch_operands = 0 : i64, tpu.core_type = #tpu.core_type<tc>, window_params = [{transform_indices = @transform_0, window_bounds = array<i64: 16, 32>}, {pipeline_mode = #tpu.pipeline_mode<synchronous>, transform_indices = @transform_1, window_bounds = array<i64: 32, 32>}, {pipeline_mode = #tpu.pipeline_mode<synchronous>, transform_indices = @transform_2, window_bounds = array<i64: 1, 32>}, {transform_indices = @transform_3, window_bounds = array<i64: 16, 32>}]} {
    %c0 = arith.constant 0 : index
    %c0_0 = arith.constant 0 : index
    %0 = vector.load %arg1[%c0, %c0_0] : memref<16x32xf32, #tpu.memory_space<vmem>>, vector<16x32xf32>
    %1 = arith.truncf %0 : vector<16x32xf32> to vector<16x32xbf16>
    %c0_1 = arith.constant 0 : index
    %c0_2 = arith.constant 0 : index
    %2 = vector.load %arg2[%c0_1, %c0_2] : memref<32x32xbf16, #tpu.memory_space<vmem>>, vector<32x32xbf16>
    %cst = arith.constant dense<0.000000e+00> : vector<16x32xf32>
    %3 = tpu.matmul %1, %2, %cst {dimension_numbers = #tpu.dot_dimension_numbers<[1], [0], [0], [1], [0, 0, 1, 1], [], []>} : vector<16x32xbf16>, vector<32x32xbf16>, vector<16x32xf32> -> vector<16x32xf32>
    %c0_3 = arith.constant 0 : index
    %c0_4 = arith.constant 0 : index
    %4 = vector.load %arg3[%c0_3, %c0_4] : memref<1x32xf32, #tpu.memory_space<vmem>>, vector<1x32xf32>
    %5 = vector.broadcast %4 : vector<1x32xf32> to vector<16x32xf32>
    %6 = arith.addf %3, %5 : vector<16x32xf32>
    %c0_5 = arith.constant 0 : index
    %c0_6 = arith.constant 0 : index
    %7 = vector.load %arg4[%c0_5, %c0_6] : memref<16x32xf32, #tpu.memory_space<vmem>>, vector<16x32xf32>
    tpu.vector_store %arg4[%c0_5, %c0_6], %6 {strides = array<i32>} : memref<16x32xf32, #tpu.memory_space<vmem>>, vector<16x32xf32>,
    return
  }
  func.func @transform_0(%arg0: i32) -> (i32, i32) {
    %c0_i32 = arith.constant 0 : i32
    %c0_i32_0 = arith.constant 0 : i32
    return %arg0, %c0_i32 : i32, i32
  }
  func.func @transform_1(%arg0: i32) -> (i32, i32) {
    %c0_i32 = arith.constant 0 : i32
    %c0_i32_0 = arith.constant 0 : i32
    %c0_i32_1 = arith.constant 0 : i32
    return %c0_i32, %c0_i32_0 : i32, i32
  }
  func.func @transform_2(%arg0: i32) -> (i32, i32) {
    %c0_i32 = arith.constant 0 : i32
    %c0_i32_0 = arith.constant 0 : i32
    %c0_i32_1 = arith.constant 0 : i32
    return %c0_i32, %c0_i32_0 : i32, i32
  }
  func.func @transform_3(%arg0: i32) -> (i32, i32) {
    %c0_i32 = arith.constant 0 : i32
    %c0_i32_0 = arith.constant 0 : i32
    return %arg0, %c0_i32 : i32, i32
  }
}

module attributes {stable_mosaic.version = 11 : i64} {
  func.func @attn_kernel(%arg0: i32, %arg1: memref<16x32xf32, #tpu.memory_space<vmem>>, %arg2: memref<32x32xbf16, #tpu.memory_space<vmem>>, %arg3: memref<1x32xf32, #tpu.memory_space<vmem>>, %arg4: memref<16x32xf32, #tpu.memory_space<vmem>>) attributes {dimension_semantics = [#tpu.dimension_semantics<parallel>], iteration_bounds = array<i64: 1>, scalar_prefetch = 0 : i64, scratch_operands = 0 : i64, tpu.core_type = #tpu.core_type<tc>, window_params = [{transform_indices = @transform_0, window_bounds = array<i64: 16, 32>}, {pipeline_mode = #tpu.pipeline_mode<synchronous>, transform_indices = @transform_1, window_bounds = array<i64: 32, 32>}, {pipeline_mode = #tpu.pipeline_mode<synchronous>, transform_indices = @transform_2, window_bounds = array<i64: 1, 32>}, {transform_indices = @transform_3, window_bounds = array<i64: 16, 32>}]} {
    %c0 = arith.constant 0 : index
    %c0_0 = arith.constant 0 : index
    %0 = vector.load %arg1[%c0, %c0_0] : memref<16x32xf32, #tpu.memory_space<vmem>>, vector<16x32xf32>
    %1 = arith.truncf %0 : vector<16x32xf32> to vector<16x32xbf16>
    %c0_1 = arith.constant 0 : index
    %c0_2 = arith.constant 0 : index
    %2 = vector.load %arg2[%c0_1, %c0_2] : memref<32x32xbf16, #tpu.memory_space<vmem>>, vector<32x32xbf16>
    %cst = arith.constant dense<0.000000e+00> : vector<16x32xf32>
    %3 = tpu.matmul %1, %2, %cst {dimension_numbers = #tpu.dot_dimension_numbers<[1], [0], [0], [1], [0, 0, 1, 1], [], []>} : vector<16x32xbf16>, vector<32x32xbf16>, vector<16x32xf32> -> vector<16x32xf32>
    %c0_3 = arith.constant 0 : index
    %c0_4 = arith.constant 0 : index
    %4 = vector.load %arg3[%c0_3, %c0_4] : memref<1x32xf32, #tpu.memory_space<vmem>>, vector<1x32xf32>
    %5 = vector.broadcast %4 : vector<1x32xf32> to vector<16x32xf32>
    %6 = arith.addf %3, %5 : vector<16x32xf32>
    %c0_5 = arith.constant 0 : index
    %c0_6 = arith.constant 0 : index
    %7 = vector.load %arg4[%c0_5, %c0_6] : memref<16x32xf32, #tpu.memory_space<vmem>>, vector<16x32xf32>
    tpu.vector_store %arg4[%c0_5, %c0_6], %6 {strides = array<i32>} : memref<16x32xf32, #tpu.memory_space<vmem>>, vector<16x32xf32>,
    return
  }
  func.func @transform_0(%arg0: i32) -> (i32, i32) {
    %c0_i32 = arith.constant 0 : i32
    %c0_i32_0 = arith.constant 0 : i32
    return %arg0, %c0_i32 : i32, i32
  }
  func.func @transform_1(%arg0: i32) -> (i32, i32) {
    %c0_i32 = arith.constant 0 : i32
    %c0_i32_0 = arith.constant 0 : i32
    %c0_i32_1 = arith.constant 0 : i32
    return %c0_i32, %c0_i32_0 : i32, i32
  }
  func.func @transform_2(%arg0: i32) -> (i32, i32) {
    %c0_i32 = arith.constant 0 : i32
    %c0_i32_0 = arith.constant 0 : i32
    %c0_i32_1 = arith.constant 0 : i32
    return %c0_i32, %c0_i32_0 : i32, i32
  }
  func.func @transform_3(%arg0: i32) -> (i32, i32) {
    %c0_i32 = arith.constant 0 : i32
    %c0_i32_0 = arith.constant 0 : i32
    return %arg0, %c0_i32 : i32, i32
  }
}

</mosaic_0001>

<llo_original>
// kernel: tpu_custom_call.1
$region0: #{tpu_custom_call.1}
  #allocation0 [shape = 'u32[]', space=smem, size = 0x4, offset = 0x4, fixed_abs, tag = 'smem constant byte address 0x4 - core index']
  #allocation1 [shape = 'u32[144,128]{1,0:T(1,128)}', space=vmem, size = 0x12000, scoped, tag = 'internal scratch']
  %s0 = inlined_call_operand.hbm [shape: f32[16,32], index: 0, kind: input, shape index: {}]
  %s1 = inlined_call_operand.hbm [shape: bf16[32,32], index: 1, kind: input, shape index: {}]
  %s2 = inlined_call_operand.vmem [shape: f32[1,32], index: 2, kind: input, shape index: {}]
  %s3 = inlined_call_operand.hbm [shape: f32[16,32], index: 3, kind: output, shape index: {}]
  %s4 = sld [smem:[#allocation0]]
  $region30: #{tpu_custom_call.1} parent=0
    _
  %s6 = ssub.s32 1, %s4
  %s7 = scalar_select 0, %s6, %s4
  $region1: #{tpu_custom_call.1} parent=0
    #allocation2 [shape = 'u8[8192]{0}', space=vmem, size = 0x2000, scoped, tag = 'input window, operand 0, single buffered']
    #allocation3 [shape = 's32[1]{0}', space=sflag, size = 0x4, scoped, tag = 'scoped memory for tpu_custom_call.1']
    #allocation4 [shape = 's32[1]{0}', space=sflag, size = 0x4, scoped, tag = 'scoped memory for tpu_custom_call.1']
    #allocation5 [shape = 'u8[8192]{0}', space=vmem, size = 0x2000, scoped, tag = 'input window, operand 1, single buffered']
    #allocation6 [shape = 's32[1]{0}', space=sflag, size = 0x4, scoped, tag = 'scoped memory for tpu_custom_call.1']
    #allocation7 [shape = 'u8[8192]{0}', space=vmem, size = 0x2000, scoped, tag = 'output window, operand 0, single buffered']
    %8 = vsyncpa [#allocation3], 0
    %9 = vsyncpa [#allocation6], 0
    %10 = vsyncpa [#allocation4], 0
    // Predicated region
    $region2: #{tpu_custom_call.1} parent=1 // pred_check
      _
    $region3: #{tpu_custom_call.1} parent=1 // pred_check_branch
      %12 = sbr.rel (0) target = $region5
    $region4: #{tpu_custom_call.1} parent=1 // pred_region
      %s14 = ssub.s32 256, 256
      %15 = vsyncadd [#allocation3], %s14
      %s16 = sshll.u32 [#allocation2], 4
      %s17 = int_to_ptr.vmem [resolvable:$true] %s16
      %22 = dma.hbm_to_vmem [thread:$0]  %s0, 256, %s17, [#allocation3], 128, 128, 8
    $region5: #{tpu_custom_call.1} parent=1 // pred_fallthru
      _
    // Predicated region
    $region6: #{tpu_custom_call.1} parent=1 // pred_check
      _
    $region7: #{tpu_custom_call.1} parent=1 // pred_check_branch
      %24 = sbr.rel (0) target = $region9
    $region8: #{tpu_custom_call.1} parent=1 // pred_region
      %s26 = ssub.s32 256, 256
      %27 = vsyncadd [#allocation6], %s26
      %s28 = sshll.u32 [#allocation5], 4
      %s29 = int_to_ptr.vmem [resolvable:$true] %s28
      %34 = dma.hbm_to_vmem [thread:$0]  %s1, 256, %s29, [#allocation6], 64, 64, 4
    $region9: #{tpu_custom_call.1} parent=1 // pred_fallthru
      _
    // Predicated region
    $region10: #{tpu_custom_call.1} parent=1 // pred_check
      _
    $region11: #{tpu_custom_call.1} parent=1 // pred_check_branch
      %36 = sbr.rel (0) target = $region13
    $region12: #{tpu_custom_call.1} parent=1 // pred_region
      _
    $region13: #{tpu_custom_call.1} parent=1 // pred_fallthru
      _
    // Predicated region
    $region14: #{tpu_custom_call.1} parent=1 // pred_check
      _
    $region15: #{tpu_custom_call.1} parent=1 // pred_check_branch
      %38 = sbr.rel (0) target = $region17
    $region16: #{tpu_custom_call.1} parent=1 // pred_region
      %39 = dma.done [#allocation3], 256
    $region17: #{tpu_custom_call.1} parent=1 // pred_fallthru
      _
    // Predicated region
    $region18: #{tpu_custom_call.1} parent=1 // pred_check
      _
    $region19: #{tpu_custom_call.1} parent=1 // pred_check_branch
      %41 = sbr.rel (0) target = $region21
    $region20: #{tpu_custom_call.1} parent=1 // pred_region
      %42 = dma.done [#allocation6], 256
    $region21: #{tpu_custom_call.1} parent=1 // pred_fallthru
      _
    %v44 = vld [vmem:[#allocation2] sm:$0xff]
    %v45 = vld [vmem:[#allocation2 + $0x8] sm:$0xff]
    %v46 = vpack.c.bf16 %v45, %v44
    %v47 = vld [vmem:[#allocation5] sm:$0xf]
    %v48 = vld [vmem:[#allocation5 + $0x4] sm:$0xf]
    %v49 = vld [vmem:[#allocation5 + $0x8] sm:$0xf]
    %v50 = vld [vmem:[#allocation5 + $0xc] sm:$0xf]
    %v51 = vld [vmem:[%s2] sm:$0x1]
    %v53 = vlaneseq
    %v54 = vshrl.u32 %v53, 7
    %v55 = vsub.s32 0, %v54
    %v56 = vrot.slane %v51, %v55
    %v62 = vunpack.c.l.b16 %v47
    %v63 = vunpack.c.l.b16 %v48
    %v64 = vunpack.c.l.b16 %v49
    %v65 = vunpack.c.l.b16 %v50
    %v66 = vpack.c.b16 %v63, %v62
    %v67 = vpack.c.b16 %v65, %v64
    %vm70 = vcmask 261120
    %v72 = vsel %vm70, %v46, 0
    %74 = vmatprep.subr.bf16.mxu0 0
    %75 = vmatpush1.bf16.msra.mxu0 %v66
    %76 = vmatprep.subr.bf16.mxu0 0
    %77 = vmatpush1.bf16.msra.mxu0 %v67
    %78 = vmatprep.subr.bf16.mxu0 0
    %79 = vmatpush1.bf16.msra.mxu0 0
    %80 = vmatprep.subr.bf16.mxu0 0
    %81 = vmatpush1.bf16.msra.mxu0 0
    %82 = vmatprep.subr.bf16.mxu0 0
    %83 = vmatpush1.bf16.msra.mxu0 0
    %84 = vmatprep.subr.bf16.mxu0 0
    %85 = vmatpush1.bf16.msra.mxu0 0
    %86 = vmatprep.subr.bf16.mxu0 0
    %87 = vmatpush1.bf16.msra.mxu0 0
    %88 = vmatprep.subr.bf16.mxu0 0
    %89 = vmatpush1.bf16.msra.mxu0 0
    %90 = vmatprep.subr.bf16.mxu0 0
    %91 = vmatpush1.bf16.msra.mxu0 0
    %92 = vmatprep.subr.bf16.mxu0 0
    %93 = vmatpush1.bf16.msra.mxu0 0
    %94 = vmatprep.subr.bf16.mxu0 0
    %95 = vmatpush1.bf16.msra.mxu0 0
    %96 = vmatprep.subr.bf16.mxu0 0
    %97 = vmatpush1.bf16.msra.mxu0 0
    %98 = vmatprep.subr.bf16.mxu0 0
    %99 = vmatpush1.bf16.msra.mxu0 0
    %100 = vmatprep.subr.bf16.mxu0 0
    %101 = vmatpush1.bf16.msra.mxu0 0
    %102 = vmatprep.subr.bf16.mxu0 0
    %103 = vmatpush1.bf16.msra.mxu0 0
    %104 = vmatprep.subr.bf16.mxu0 0
    %105 = vmatpush1.bf16.msra.mxu0 0
    %106 = vmatprep.mubr.bf16.mxu0 0
    %107 = vmatmul.mubr.bf16.gmra.mrb[0].mxu0 %v72
    %v108 = vpop.f32.mrb[0].mxu0
    %v109 = vadd.f32 %v56, %v108
    %v110 = vpop.f32.mrb[0].mxu0
    %v111 = vpop.f32.mrb[0].mxu0
    %v112 = vadd.f32 %v56, %v111
    %v113 = vpop.f32.mrb[0].mxu0
    %114 = vdwg.mxu0
    %115 = vst.msk [vmem:[#allocation7] sm:$0xff] %vm70, %v109
    %116 = vst.msk [vmem:[#allocation7 + $0x8] sm:$0xff] %vm70, %v112
    // Predicated region
    $region22: #{tpu_custom_call.1} parent=1 // pred_check
      _
    $region23: #{tpu_custom_call.1} parent=1 // pred_check_branch
      %118 = sbr.rel (0) target = $region25
    $region24: #{tpu_custom_call.1} parent=1 // pred_region
      %s120 = ssub.s32 256, 256
      %121 = vsyncadd [#allocation4], %s120
      %s122 = sshll.u32 [#allocation7], 4
      %s123 = int_to_ptr.vmem [resolvable:$true] %s122
      %128 = dma.vmem_to_hbm [thread:$0]  %s123, 256, %s3, [#allocation4], 128, 128, 8
    $region25: #{tpu_custom_call.1} parent=1 // pred_fallthru
      _
    // Predicated region
    $region26: #{tpu_custom_call.1} parent=1 // pred_check
      _
    $region27: #{tpu_custom_call.1} parent=1 // pred_check_branch
      %130 = sbr.rel (0) target = $region29
    $region28: #{tpu_custom_call.1} parent=1 // pred_region
      %131 = dma.done [#allocation4], 256
    $region29: #{tpu_custom_call.1} parent=1 // pred_fallthru
      _
    %132 = vsyncpa [#allocation3], 1
    %133 = vsyncpa [#allocation6], 1
    %134 = vsyncpa [#allocation4], 1

// kernel: tpu_custom_call.1
$region0: #{tpu_custom_call.1}
  #allocation0 [shape = 'u32[]', space=smem, size = 0x4, offset = 0x4, fixed_abs, tag = 'smem constant byte address 0x4 - core index']
  #allocation1 [shape = 'u32[144,128]{1,0:T(1,128)}', space=vmem, size = 0x12000, scoped, tag = 'internal scratch']
  %s0 = inlined_call_operand.hbm [shape: f32[16,32], index: 0, kind: input, shape index: {}]
  %s1 = inlined_call_operand.hbm [shape: bf16[32,32], index: 1, kind: input, shape index: {}]
  %s2 = inlined_call_operand.vmem [shape: f32[1,32], index: 2, kind: input, shape index: {}]
  %s3 = inlined_call_operand.hbm [shape: f32[16,32], index: 3, kind: output, shape index: {}]
  %s4 = sld [smem:[#allocation0]]
  $region30: #{tpu_custom_call.1} parent=0
    _
  %s6 = ssub.s32 1, %s4
  %s7 = scalar_select 0, %s6, %s4
  $region1: #{tpu_custom_call.1} parent=0
    #allocation2 [shape = 'u8[8192]{0}', space=vmem, size = 0x2000, scoped, tag = 'input window, operand 0, single buffered']
    #allocation3 [shape = 's32[1]{0}', space=sflag, size = 0x4, scoped, tag = 'scoped memory for tpu_custom_call.1']
    #allocation4 [shape = 's32[1]{0}', space=sflag, size = 0x4, scoped, tag = 'scoped memory for tpu_custom_call.1']
    #allocation5 [shape = 'u8[8192]{0}', space=vmem, size = 0x2000, scoped, tag = 'input window, operand 1, single buffered']
    #allocation6 [shape = 's32[1]{0}', space=sflag, size = 0x4, scoped, tag = 'scoped memory for tpu_custom_call.1']
    #allocation7 [shape = 'u8[8192]{0}', space=vmem, size = 0x2000, scoped, tag = 'output window, operand 0, single buffered']
    %8 = vsyncpa [#allocation3], 0
    %9 = vsyncpa [#allocation6], 0
    %10 = vsyncpa [#allocation4], 0
    // Predicated region
    $region2: #{tpu_custom_call.1} parent=1 // pred_check
      _
    $region3: #{tpu_custom_call.1} parent=1 // pred_check_branch
      %12 = sbr.rel (0) target = $region5
    $region4: #{tpu_custom_call.1} parent=1 // pred_region
      %s14 = ssub.s32 256, 256
      %15 = vsyncadd [#allocation3], %s14
      %s16 = sshll.u32 [#allocation2], 4
      %s17 = int_to_ptr.vmem [resolvable:$true] %s16
      %22 = dma.hbm_to_vmem [thread:$0]  %s0, 256, %s17, [#allocation3], 128, 128, 8
    $region5: #{tpu_custom_call.1} parent=1 // pred_fallthru
      _
    // Predicated region
    $region6: #{tpu_custom_call.1} parent=1 // pred_check
      _
    $region7: #{tpu_custom_call.1} parent=1 // pred_check_branch
      %24 = sbr.rel (0) target = $region9
    $region8: #{tpu_custom_call.1} parent=1 // pred_region
      %s26 = ssub.s32 256, 256
      %27 = vsyncadd [#allocation6], %s26
      %s28 = sshll.u32 [#allocation5], 4
      %s29 = int_to_ptr.vmem [resolvable:$true] %s28
      %34 = dma.hbm_to_vmem [thread:$0]  %s1, 256, %s29, [#allocation6], 64, 64, 4
    $region9: #{tpu_custom_call.1} parent=1 // pred_fallthru
      _
    // Predicated region
    $region10: #{tpu_custom_call.1} parent=1 // pred_check
      _
    $region11: #{tpu_custom_call.1} parent=1 // pred_check_branch
      %36 = sbr.rel (0) target = $region13
    $region12: #{tpu_custom_call.1} parent=1 // pred_region
      _
    $region13: #{tpu_custom_call.1} parent=1 // pred_fallthru
      _
    // Predicated region
    $region14: #{tpu_custom_call.1} parent=1 // pred_check
      _
    $region15: #{tpu_custom_call.1} parent=1 // pred_check_branch
      %38 = sbr.rel (0) target = $region17
    $region16: #{tpu_custom_call.1} parent=1 // pred_region
      %39 = dma.done [#allocation3], 256
    $region17: #{tpu_custom_call.1} parent=1 // pred_fallthru
      _
    // Predicated region
    $region18: #{tpu_custom_call.1} parent=1 // pred_check
      _
    $region19: #{tpu_custom_call.1} parent=1 // pred_check_branch
      %41 = sbr.rel (0) target = $region21
    $region20: #{tpu_custom_call.1} parent=1 // pred_region
      %42 = dma.done [#allocation6], 256
    $region21: #{tpu_custom_call.1} parent=1 // pred_fallthru
      _
    %v44 = vld [vmem:[#allocation2] sm:$0xff]
    %v45 = vld [vmem:[#allocation2 + $0x8] sm:$0xff]
    %v46 = vpack.c.bf16 %v45, %v44
    %v47 = vld [vmem:[#allocation5] sm:$0xf]
    %v48 = vld [vmem:[#allocation5 + $0x4] sm:$0xf]
    %v49 = vld [vmem:[#allocation5 + $0x8] sm:$0xf]
    %v50 = vld [vmem:[#allocation5 + $0xc] sm:$0xf]
    %v51 = vld [vmem:[%s2] sm:$0x1]
    %v53 = vlaneseq
    %v54 = vshrl.u32 %v53, 7
    %v55 = vsub.s32 0, %v54
    %v56 = vrot.slane %v51, %v55
    %v62 = vunpack.c.l.b16 %v47
    %v63 = vunpack.c.l.b16 %v48
    %v64 = vunpack.c.l.b16 %v49
    %v65 = vunpack.c.l.b16 %v50
    %v66 = vpack.c.b16 %v63, %v62
    %v67 = vpack.c.b16 %v65, %v64
    %vm70 = vcmask 261120
    %v72 = vsel %vm70, %v46, 0
    %74 = vmatprep.subr.bf16.mxu0 0
    %75 = vmatpush1.bf16.msra.mxu0 %v66
    %76 = vmatprep.subr.bf16.mxu0 0
    %77 = vmatpush1.bf16.msra.mxu0 %v67
    %78 = vmatprep.subr.bf16.mxu0 0
    %79 = vmatpush1.bf16.msra.mxu0 0
    %80 = vmatprep.subr.bf16.mxu0 0
    %81 = vmatpush1.bf16.msra.mxu0 0
    %82 = vmatprep.subr.bf16.mxu0 0
    %83 = vmatpush1.bf16.msra.mxu0 0
    %84 = vmatprep.subr.bf16.mxu0 0
    %85 = vmatpush1.bf16.msra.mxu0 0
    %86 = vmatprep.subr.bf16.mxu0 0
    %87 = vmatpush1.bf16.msra.mxu0 0
    %88 = vmatprep.subr.bf16.mxu0 0
    %89 = vmatpush1.bf16.msra.mxu0 0
    %90 = vmatprep.subr.bf16.mxu0 0
    %91 = vmatpush1.bf16.msra.mxu0 0
    %92 = vmatprep.subr.bf16.mxu0 0
    %93 = vmatpush1.bf16.msra.mxu0 0
    %94 = vmatprep.subr.bf16.mxu0 0
    %95 = vmatpush1.bf16.msra.mxu0 0
    %96 = vmatprep.subr.bf16.mxu0 0
    %97 = vmatpush1.bf16.msra.mxu0 0
    %98 = vmatprep.subr.bf16.mxu0 0
    %99 = vmatpush1.bf16.msra.mxu0 0
    %100 = vmatprep.subr.bf16.mxu0 0
    %101 = vmatpush1.bf16.msra.mxu0 0
    %102 = vmatprep.subr.bf16.mxu0 0
    %103 = vmatpush1.bf16.msra.mxu0 0
    %104 = vmatprep.subr.bf16.mxu0 0
    %105 = vmatpush1.bf16.msra.mxu0 0
    %106 = vmatprep.mubr.bf16.mxu0 0
    %107 = vmatmul.mubr.bf16.gmra.mrb[0].mxu0 %v72
    %v108 = vpop.f32.mrb[0].mxu0
    %v109 = vadd.f32 %v56, %v108
    %v110 = vpop.f32.mrb[0].mxu0
    %v111 = vpop.f32.mrb[0].mxu0
    %v112 = vadd.f32 %v56, %v111
    %v113 = vpop.f32.mrb[0].mxu0
    %114 = vdwg.mxu0
    %115 = vst.msk [vmem:[#allocation7] sm:$0xff] %vm70, %v109
    %116 = vst.msk [vmem:[#allocation7 + $0x8] sm:$0xff] %vm70, %v112
    // Predicated region
    $region22: #{tpu_custom_call.1} parent=1 // pred_check
      _
    $region23: #{tpu_custom_call.1} parent=1 // pred_check_branch
      %118 = sbr.rel (0) target = $region25
    $region24: #{tpu_custom_call.1} parent=1 // pred_region
      %s120 = ssub.s32 256, 256
      %121 = vsyncadd [#allocation4], %s120
      %s122 = sshll.u32 [#allocation7], 4
      %s123 = int_to_ptr.vmem [resolvable:$true] %s122
      %128 = dma.vmem_to_hbm [thread:$0]  %s123, 256, %s3, [#allocation4], 128, 128, 8
    $region25: #{tpu_custom_call.1} parent=1 // pred_fallthru
      _
    // Predicated region
    $region26: #{tpu_custom_call.1} parent=1 // pred_check
      _
    $region27: #{tpu_custom_call.1} parent=1 // pred_check_branch
      %130 = sbr.rel (0) target = $region29
    $region28: #{tpu_custom_call.1} parent=1 // pred_region
      %131 = dma.done [#allocation4], 256
    $region29: #{tpu_custom_call.1} parent=1 // pred_fallthru
      _
    %132 = vsyncpa [#allocation3], 1
    %133 = vsyncpa [#allocation6], 1
    %134 = vsyncpa [#allocation4], 1

</llo_original>
